<compile_context>
chip_gen: v6e
topology: v6e:2x2x1
jax: 0.10.0
libtpu: 0.0.40
codegen_flags: <defaults>
</compile_context>

<pallas_src>
import math
from functools import partial

import jax
import jax.numpy as jnp
from jax.experimental import pallas as pl
from jax.experimental.pallas import tpu as pltpu

LANE = 128        # lane width (last dim)
BATCH_ALIGN = 16  # batch rounding (bf16-safe sublane multiple; also fine for f32)


def _round_up(x, m):
    return ((x + m - 1) // m) * m


# ----------------------------- Pallas kernel --------------------------------

def _sde_policy_kernel(x_ref, w1_ref, b1_ref, w2_ref, b2_ref, wc_ref, bc_ref,
                       out_ref):
    """h2 = relu(relu(x@W1+b1)@W2+b2); out = h2 @ [I | Wm] + [0 | bm]."""
    x = x_ref[...]                                                    # (TB, Dsp) bf16
    h = jnp.dot(x, w1_ref[...], preferred_element_type=jnp.float32) + b1_ref[...]
    h = jnp.maximum(h, 0.0)                                           # (TB, H0p) f32
    h2 = jnp.dot(h.astype(jnp.bfloat16), w2_ref[...],
                 preferred_element_type=jnp.float32) + b2_ref[...]
    h2 = jnp.maximum(h2, 0.0)                                         # (TB, H1p) f32
    # combined output: cols [0:h1] = latent passthrough, cols [h1:h1+A] = mu
    out = jnp.dot(h2.astype(jnp.bfloat16), wc_ref[...],
                  preferred_element_type=jnp.float32) + bc_ref[...]   # (TB, COMBp)
    out_ref[...] = out.astype(out_ref.dtype)


# ------------------------------- wrapper -------------------------------------

@partial(jax.jit, static_argnames=("dims", "batch_tile"))
def _forward_jit(state, w1, b1, w2, b2, wc, bc, *, dims, batch_tile):
    state_dim, h0, h1, action_dim = dims
    B = state.shape[0]
    Dsp, H0p = w1.shape
    H1p, COMBp = wc.shape

    # ---- batch tiling: balanced tiles, >= 2 (even) grid steps for mid/large B
    B_r = _round_up(max(B, 1), BATCH_ALIGN)
    nb = pl.cdiv(B_r, batch_tile)
    if nb == 1 and B_r >= 512:
        nb = 2                       # keep both v7x TensorCores busy
    if nb > 1 and nb % 2 == 1:
        nb += 1                      # even split across 2 TCs
    TB = _round_up(pl.cdiv(B_r, nb), BATCH_ALIGN)
    Bp = nb * TB

    # bf16 input slab, padded only in batch (and state_dim up to a sublane multiple)
    x = jnp.zeros((Bp, Dsp), jnp.bfloat16)
    x = x.at[:B, :state_dim].set(state.astype(jnp.bfloat16))

    batch_map = lambda i: (i, 0)     # tiles over batch
    const_map = lambda i: (0, 0)     # weights resident across grid steps

    # TODO(synk): pipeline_mode=pl.Buffered(1) on the constant weight specs would
    # drop their redundant second VMEM buffer; omitted for lowering portability.
    in_specs = [
        pl.BlockSpec((TB, Dsp), batch_map),     # x   (bf16)
        pl.BlockSpec((Dsp, H0p), const_map),    # w1  (bf16)
        pl.BlockSpec((1, H0p), const_map),      # b1  (f32)
        pl.BlockSpec((H0p, H1p), const_map),    # w2  (bf16)
        pl.BlockSpec((1, H1p), const_map),      # b2  (f32)
        pl.BlockSpec((H1p, COMBp), const_map),  # wc = [I | wm]  (bf16)
        pl.BlockSpec((1, COMBp), const_map),    # bc = [0 | bm]  (f32)
    ]
    out_spec = pl.BlockSpec((TB, COMBp), batch_map)
    out_shape = jax.ShapeDtypeStruct((Bp, COMBp), jnp.float32)

    # advisory cost estimate + explicit VMEM budget (v5e default is only 16 MiB)
    flops = 2 * Bp * (Dsp * H0p + H0p * H1p + H1p * COMBp)
    wbytes = 2 * (Dsp * H0p + H0p * H1p + H1p * COMBp) + 4 * (H0p + H1p + COMBp)
    bytes_accessed = 2 * Bp * Dsp + wbytes + 4 * Bp * COMBp
    vmem_est = (2 * TB * Dsp * 2 + 2 * TB * COMBp * 4
                + TB * (H0p + H1p) * 4 + wbytes + (2 << 20))
    vmem_limit = int(min(max(vmem_est, 16 << 20), 64 << 20))

    out_p = pl.pallas_call(
        _sde_policy_kernel,
        out_shape=out_shape,
        grid=(nb,),
        in_specs=in_specs,
        out_specs=out_spec,
        compiler_params=pltpu.CompilerParams(
            dimension_semantics=("parallel",),
            vmem_limit_bytes=vmem_limit),
        cost_estimate=pl.CostEstimate(
            flops=flops, transcendentals=0, bytes_accessed=bytes_accessed),
    )(x, w1, b1, w2, b2, wc, bc)

    latent = out_p[:B, :h1]
    mu = out_p[:B, h1:h1 + action_dim]
    return mu, latent


def sde_policy_forward(state, kparams, *, batch_tile=1024):
    """state: (B, state_dim) -> (mu (B, A), log_std (h1, A), latent (B, h1))."""
    state_dim = kparams["dims"][0]
    assert state.shape[-1] == state_dim
    mu, latent = _forward_jit(
        state, kparams["w1"], kparams["b1"], kparams["w2"], kparams["b2"],
        kparams["wc"], kparams["bc"], dims=kparams["dims"], batch_tile=batch_tile)
    # torch forward returns (mu, log_std); latent_sde is stashed as module state
    return mu, kparams["log_std"], latent


# --------------------------- parameter creation ------------------------------

def _xavier_uniform(key, fan_in, fan_out, gain=1.0):
    bound = gain * math.sqrt(6.0 / (fan_in + fan_out))
    # stored as (in, out) so the kernel does x @ W
    return jax.random.uniform(key, (fan_in, fan_out), jnp.float32, -bound, bound)


def make_params(key, state_dim, action_dim, hidden_sizes=(64, 64), log_std_init=-2.0):
    h0, h1 = hidden_sizes
    k1, k2, k3 = jax.random.split(key, 3)
    return {
        "w1": _xavier_uniform(k1, state_dim, h0),
        "b1": jnp.zeros((h0,), jnp.float32),
        "w2": _xavier_uniform(k2, h0, h1),
        "b2": jnp.zeros((h1,), jnp.float32),
        "wm": _xavier_uniform(k3, h1, action_dim),
        "bm": jnp.zeros((action_dim,), jnp.float32),
        # nn.Parameter(ones(h1, action_dim) * log_std_init)
        "log_std": jnp.full((h1, action_dim), log_std_init, jnp.float32),
    }
    # TODO(synk): exploration_mat / _sample_weights (Normal.rsample of std(log_std))
    # and TanhBijector belong to dist()/sample(), not forward(); not implemented here.


def prepare_kernel_params(params, state_dim, action_dim, hidden_sizes):
    """One-time: pad feature dims, cast weights to bf16, pack [latent | mu] head."""
    h0, h1 = hidden_sizes
    Dsp = _round_up(state_dim, 8)              # sublane-friendly contraction dim only
    H0p, H1p = _round_up(h0, LANE), _round_up(h1, LANE)
    COMBp = _round_up(h1 + action_dim, LANE)   # one lane-dense combined output slab

    def pad2(a, r, c):
        return jnp.pad(a, ((0, r - a.shape[0]), (0, c - a.shape[1])))

    # combined final layer: columns [0:h1] pass the latent through (identity),
    # columns [h1:h1+A] are the mu layer.
    wc = jnp.zeros((H1p, COMBp), jnp.float32)
    wc = wc.at[:h1, :h1].set(jnp.eye(h1, dtype=jnp.float32))
    wc = wc.at[:h1, h1:h1 + action_dim].set(params["wm"])
    bc = jnp.zeros((1, COMBp), jnp.float32).at[0, h1:h1 + action_dim].set(params["bm"])

    return {
        "w1": pad2(params["w1"], Dsp, H0p).astype(jnp.bfloat16),
        "b1": pad2(params["b1"][None, :], 1, H0p).astype(jnp.float32),
        "w2": pad2(params["w2"], H0p, H1p).astype(jnp.bfloat16),
        "b2": pad2(params["b2"][None, :], 1, H1p).astype(jnp.float32),
        "wc": wc.astype(jnp.bfloat16),
        "bc": bc,
        "log_std": params["log_std"],
        "dims": (state_dim, h0, h1, action_dim),
    }


# -------------------------------- reference ----------------------------------

def reference_forward(state, params):
    """Pure-JAX reference with the same bf16-operand / f32-accumulate numerics."""
    def mm(a, w):
        return jnp.dot(a.astype(jnp.bfloat16), w.astype(jnp.bfloat16),
                       preferred_element_type=jnp.float32)
    h = jnp.maximum(mm(state, params["w1"]) + params["b1"], 0.0)
    h = jnp.maximum(mm(h, params["w2"]) + params["b2"], 0.0)
    mu = mm(h, params["wm"]) + params["bm"]
    return mu, params["log_std"], h


# ---------------------------------- main --------------------------------------

if __name__ == "__main__":
    B, STATE_DIM, ACTION_DIM = 2, 16, 4
    HIDDEN = (64, 64)   # module default hidden_sizes

    key = jax.random.PRNGKey(0)
    k_state, k_params = jax.random.split(key)

    state = jax.random.normal(k_state, (B, STATE_DIM), jnp.float32)
    params = make_params(k_params, STATE_DIM, ACTION_DIM, HIDDEN, log_std_init=-2.0)
    kparams = prepare_kernel_params(params, STATE_DIM, ACTION_DIM, HIDDEN)

    mu, log_std, latent = sde_policy_forward(state, kparams)
    mu = jax.block_until_ready(mu)
    latent = jax.block_until_ready(latent)

    mu_ref, log_std_ref, latent_ref = reference_forward(state, params)

    assert mu.shape == (B, ACTION_DIM)
    assert log_std.shape == (HIDDEN[-1], ACTION_DIM)
    assert latent.shape == (B, HIDDEN[-1])
    assert jnp.allclose(mu, mu_ref, atol=2e-2, rtol=2e-2)
    assert jnp.allclose(latent, latent_ref, atol=2e-2, rtol=2e-2)
    assert jnp.allclose(log_std, log_std_ref)

    print("KERNEL_OK")
</pallas_src>

<mosaic_0001>
module attributes {stable_mosaic.version = 11 : i64} {
  func.func @_sde_policy_kernel(%arg0: i32, %arg1: memref<16x16xbf16, #tpu.memory_space<vmem>>, %arg2: memref<16x128xbf16, #tpu.memory_space<vmem>>, %arg3: memref<1x128xf32, #tpu.memory_space<vmem>>, %arg4: memref<128x128xbf16, #tpu.memory_space<vmem>>, %arg5: memref<1x128xf32, #tpu.memory_space<vmem>>, %arg6: memref<128x128xbf16, #tpu.memory_space<vmem>>, %arg7: memref<1x128xf32, #tpu.memory_space<vmem>>, %arg8: memref<16x128xf32, #tpu.memory_space<vmem>>) attributes {dimension_semantics = [#tpu.dimension_semantics<parallel>], iteration_bounds = array<i64: 1>, scalar_prefetch = 0 : i64, scratch_operands = 0 : i64, tpu.core_type = #tpu.core_type<tc>, window_params = [{transform_indices = @transform_0, window_bounds = array<i64: 16, 16>}, {pipeline_mode = #tpu.pipeline_mode<synchronous>, transform_indices = @transform_1, window_bounds = array<i64: 16, 128>}, {pipeline_mode = #tpu.pipeline_mode<synchronous>, transform_indices = @transform_2, window_bounds = array<i64: 1, 128>}, {pipeline_mode = #tpu.pipeline_mode<synchronous>, transform_indices = @transform_3, window_bounds = array<i64: 128, 128>}, {pipeline_mode = #tpu.pipeline_mode<synchronous>, transform_indices = @transform_4, window_bounds = array<i64: 1, 128>}, {pipeline_mode = #tpu.pipeline_mode<synchronous>, transform_indices = @transform_5, window_bounds = array<i64: 128, 128>}, {pipeline_mode = #tpu.pipeline_mode<synchronous>, transform_indices = @transform_6, window_bounds = array<i64: 1, 128>}, {transform_indices = @transform_7, window_bounds = array<i64: 16, 128>}]} {
    %c0 = arith.constant 0 : index
    %c0_0 = arith.constant 0 : index
    %0 = vector.load %arg1[%c0, %c0_0] : memref<16x16xbf16, #tpu.memory_space<vmem>>, vector<16x16xbf16>
    %c0_1 = arith.constant 0 : index
    %c0_2 = arith.constant 0 : index
    %1 = vector.load %arg2[%c0_1, %c0_2] : memref<16x128xbf16, #tpu.memory_space<vmem>>, vector<16x128xbf16>
    %cst = arith.constant dense<0.000000e+00> : vector<16x128xf32>
    %2 = tpu.matmul %0, %1, %cst {dimension_numbers = #tpu.dot_dimension_numbers<[1], [0], [0], [1], [0, 0, 1, 1], [], []>} : vector<16x16xbf16>, vector<16x128xbf16>, vector<16x128xf32> -> vector<16x128xf32>
    %c0_3 = arith.constant 0 : index
    %c0_4 = arith.constant 0 : index
    %3 = vector.load %arg3[%c0_3, %c0_4] : memref<1x128xf32, #tpu.memory_space<vmem>>, vector<1x128xf32>
    %4 = vector.broadcast %3 : vector<1x128xf32> to vector<16x128xf32>
    %5 = arith.addf %2, %4 : vector<16x128xf32>
    %cst_5 = arith.constant 0.000000e+00 : f32
    %6 = vector.broadcast %cst_5 : f32 to vector<16x128xf32>
    %7 = arith.maximumf %5, %6 : vector<16x128xf32>
    %8 = arith.truncf %7 : vector<16x128xf32> to vector<16x128xbf16>
    %c0_6 = arith.constant 0 : index
    %c0_7 = arith.constant 0 : index
    %9 = vector.load %arg4[%c0_6, %c0_7] : memref<128x128xbf16, #tpu.memory_space<vmem>>, vector<128x128xbf16>
    %cst_8 = arith.constant dense<0.000000e+00> : vector<16x128xf32>
    %10 = tpu.matmul %8, %9, %cst_8 {dimension_numbers = #tpu.dot_dimension_numbers<[1], [0], [0], [1], [0, 0, 1, 1], [], []>} : vector<16x128xbf16>, vector<128x128xbf16>, vector<16x128xf32> -> vector<16x128xf32>
    %c0_9 = arith.constant 0 : index
    %c0_10 = arith.constant 0 : index
    %11 = vector.load %arg5[%c0_9, %c0_10] : memref<1x128xf32, #tpu.memory_space<vmem>>, vector<1x128xf32>
    %12 = vector.broadcast %11 : vector<1x128xf32> to vector<16x128xf32>
    %13 = arith.addf %10, %12 : vector<16x128xf32>
    %cst_11 = arith.constant 0.000000e+00 : f32
    %14 = vector.broadcast %cst_11 : f32 to vector<16x128xf32>
    %15 = arith.maximumf %13, %14 : vector<16x128xf32>
    %16 = arith.truncf %15 : vector<16x128xf32> to vector<16x128xbf16>
    %c0_12 = arith.constant 0 : index
    %c0_13 = arith.constant 0 : index
    %17 = vector.load %arg6[%c0_12, %c0_13] : memref<128x128xbf16, #tpu.memory_space<vmem>>, vector<128x128xbf16>
    %cst_14 = arith.constant dense<0.000000e+00> : vector<16x128xf32>
    %18 = tpu.matmul %16, %17, %cst_14 {dimension_numbers = #tpu.dot_dimension_numbers<[1], [0], [0], [1], [0, 0, 1, 1], [], []>} : vector<16x128xbf16>, vector<128x128xbf16>, vector<16x128xf32> -> vector<16x128xf32>
    %c0_15 = arith.constant 0 : index
    %c0_16 = arith.constant 0 : index
    %19 = vector.load %arg7[%c0_15, %c0_16] : memref<1x128xf32, #tpu.memory_space<vmem>>, vector<1x128xf32>
    %20 = vector.broadcast %19 : vector<1x128xf32> to vector<16x128xf32>
    %21 = arith.addf %18, %20 : vector<16x128xf32>
    %c0_17 = arith.constant 0 : index
    %c0_18 = arith.constant 0 : index
    %22 = vector.load %arg8[%c0_17, %c0_18] : memref<16x128xf32, #tpu.memory_space<vmem>>, vector<16x128xf32>
    tpu.vector_store %arg8[%c0_17, %c0_18], %21 {strides = array<i32>} : memref<16x128xf32, #tpu.memory_space<vmem>>, vector<16x128xf32>,
    return
  }
  func.func @transform_0(%arg0: i32) -> (i32, i32) {
    %c0_i32 = arith.constant 0 : i32
    %c0_i32_0 = arith.constant 0 : i32
    return %arg0, %c0_i32 : i32, i32
  }
  func.func @transform_1(%arg0: i32) -> (i32, i32) {
    %c0_i32 = arith.constant 0 : i32
    %c0_i32_0 = arith.constant 0 : i32
    %c0_i32_1 = arith.constant 0 : i32
    return %c0_i32, %c0_i32_0 : i32, i32
  }
  func.func @transform_2(%arg0: i32) -> (i32, i32) {
    %c0_i32 = arith.constant 0 : i32
    %c0_i32_0 = arith.constant 0 : i32
    %c0_i32_1 = arith.constant 0 : i32
    return %c0_i32, %c0_i32_0 : i32, i32
  }
  func.func @transform_3(%arg0: i32) -> (i32, i32) {
    %c0_i32 = arith.constant 0 : i32
    %c0_i32_0 = arith.constant 0 : i32
    %c0_i32_1 = arith.constant 0 : i32
    return %c0_i32, %c0_i32_0 : i32, i32
  }
  func.func @transform_4(%arg0: i32) -> (i32, i32) {
    %c0_i32 = arith.constant 0 : i32
    %c0_i32_0 = arith.constant 0 : i32
    %c0_i32_1 = arith.constant 0 : i32
    return %c0_i32, %c0_i32_0 : i32, i32
  }
  func.func @transform_5(%arg0: i32) -> (i32, i32) {
    %c0_i32 = arith.constant 0 : i32
    %c0_i32_0 = arith.constant 0 : i32
    %c0_i32_1 = arith.constant 0 : i32
    return %c0_i32, %c0_i32_0 : i32, i32
  }
  func.func @transform_6(%arg0: i32) -> (i32, i32) {
    %c0_i32 = arith.constant 0 : i32
    %c0_i32_0 = arith.constant 0 : i32
    %c0_i32_1 = arith.constant 0 : i32
    return %c0_i32, %c0_i32_0 : i32, i32
  }
  func.func @transform_7(%arg0: i32) -> (i32, i32) {
    %c0_i32 = arith.constant 0 : i32
    %c0_i32_0 = arith.constant 0 : i32
    return %arg0, %c0_i32 : i32, i32
  }
}

</mosaic_0001>

<llo_original>
// kernel: _forward_jit.1
$region0: #{_forward_jit.1}
  #allocation0 [shape = 'u32[]', space=smem, size = 0x4, offset = 0x4, fixed_abs, tag = 'smem constant byte address 0x4 - core index']
  #allocation1 [shape = 'u32[144,128]{1,0:T(1,128)}', space=vmem, size = 0x12000, scoped, tag = 'internal scratch']
  %s0 = inlined_call_operand.vmem [shape: bf16[16,16], index: 0, kind: input, shape index: {}]
  %s1 = inlined_call_operand.vmem [shape: bf16[16,128], index: 1, kind: input, shape index: {}]
  %s2 = inlined_call_operand.vmem [shape: f32[1,128], index: 2, kind: input, shape index: {}]
  %s3 = inlined_call_operand.hbm [shape: bf16[128,128], index: 3, kind: input, shape index: {}]
  %s4 = inlined_call_operand.vmem [shape: f32[1,128], index: 4, kind: input, shape index: {}]
  %s5 = inlined_call_operand.hbm [shape: bf16[128,128], index: 5, kind: input, shape index: {}]
  %s6 = inlined_call_operand.vmem [shape: f32[1,128], index: 6, kind: input, shape index: {}]
  %s7 = inlined_call_operand.vmem [shape: f32[16,128], index: 7, kind: output, shape index: {}]
  %s8 = sld [smem:[#allocation0]]
  $region46: #{_forward_jit.1} parent=0
    _
  %s10 = ssub.s32 1, %s8
  %s11 = scalar_select 0, %s10, %s8
  $region1: #{_forward_jit.1} parent=0
    #allocation2 [shape = 'u8[32768]{0}', space=vmem, size = 0x8000, scoped, tag = 'input window, operand 3, single buffered']
    #allocation3 [shape = 's32[1]{0}', space=sflag, size = 0x4, scoped, tag = 'scoped memory for _forward_jit.1']
    #allocation4 [shape = 'u8[32768]{0}', space=vmem, size = 0x8000, scoped, tag = 'input window, operand 5, single buffered']
    #allocation5 [shape = 's32[1]{0}', space=sflag, size = 0x4, scoped, tag = 'scoped memory for _forward_jit.1']
    %12 = vsyncpa [#allocation3], 0
    %13 = vsyncpa [#allocation5], 0
    // Predicated region
    $region2: #{_forward_jit.1} parent=1 // pred_check
      _
    $region3: #{_forward_jit.1} parent=1 // pred_check_branch
      %15 = sbr.rel (0) target = $region5
    $region4: #{_forward_jit.1} parent=1 // pred_region
      _
    $region5: #{_forward_jit.1} parent=1 // pred_fallthru
      _
    // Predicated region
    $region6: #{_forward_jit.1} parent=1 // pred_check
      _
    $region7: #{_forward_jit.1} parent=1 // pred_check_branch
      %17 = sbr.rel (0) target = $region9
    $region8: #{_forward_jit.1} parent=1 // pred_region
      _
    $region9: #{_forward_jit.1} parent=1 // pred_fallthru
      _
    // Predicated region
    $region10: #{_forward_jit.1} parent=1 // pred_check
      _
    $region11: #{_forward_jit.1} parent=1 // pred_check_branch
      %19 = sbr.rel (0) target = $region13
    $region12: #{_forward_jit.1} parent=1 // pred_region
      _
    $region13: #{_forward_jit.1} parent=1 // pred_fallthru
      _
    // Predicated region
    $region14: #{_forward_jit.1} parent=1 // pred_check
      _
    $region15: #{_forward_jit.1} parent=1 // pred_check_branch
      %21 = sbr.rel (0) target = $region17
    $region16: #{_forward_jit.1} parent=1 // pred_region
      %s23 = ssub.s32 1024, 1024
      %24 = vsyncadd [#allocation3], %s23
      %s25 = sshll.u32 [#allocation2], 4
      %s26 = int_to_ptr.vmem [resolvable:$true] %s25
      %31 = dma.hbm_to_vmem [thread:$0]  %s3, 1024, %s26, [#allocation3], 64, 64, 4
    $region17: #{_forward_jit.1} parent=1 // pred_fallthru
      _
    // Predicated region
    $region18: #{_forward_jit.1} parent=1 // pred_check
      _
    $region19: #{_forward_jit.1} parent=1 // pred_check_branch
      %33 = sbr.rel (0) target = $region21
    $region20: #{_forward_jit.1} parent=1 // pred_region
      _
    $region21: #{_forward_jit.1} parent=1 // pred_fallthru
      _
    // Predicated region
    $region22: #{_forward_jit.1} parent=1 // pred_check
      _
    $region23: #{_forward_jit.1} parent=1 // pred_check_branch
      %35 = sbr.rel (0) target = $region25
    $region24: #{_forward_jit.1} parent=1 // pred_region
      %s37 = ssub.s32 1024, 1024
      %38 = vsyncadd [#allocation5], %s37
      %s39 = sshll.u32 [#allocation4], 4
      %s40 = int_to_ptr.vmem [resolvable:$true] %s39
      %45 = dma.hbm_to_vmem [thread:$0]  %s5, 1024, %s40, [#allocation5], 64, 64, 4
    $region25: #{_forward_jit.1} parent=1 // pred_fallthru
      _
    // Predicated region
    $region26: #{_forward_jit.1} parent=1 // pred_check
      _
    $region27: #{_forward_jit.1} parent=1 // pred_check_branch
      %47 = sbr.rel (0) target = $region29
    $region28: #{_forward_jit.1} parent=1 // pred_region
      _
    $region29: #{_forward_jit.1} parent=1 // pred_fallthru
      _
    // Predicated region
    $region30: #{_forward_jit.1} parent=1 // pred_check
      _
    $region31: #{_forward_jit.1} parent=1 // pred_check_branch
      %49 = sbr.rel (0) target = $region33
    $region32: #{_forward_jit.1} parent=1 // pred_region
      %50 = dma.done [#allocation3], 1024
    $region33: #{_forward_jit.1} parent=1 // pred_fallthru
      _
    // Predicated region
    $region34: #{_forward_jit.1} parent=1 // pred_check
      _
    $region35: #{_forward_jit.1} parent=1 // pred_check_branch
      %52 = sbr.rel (0) target = $region37
    $region36: #{_forward_jit.1} parent=1 // pred_region
      %53 = dma.done [#allocation5], 1024
    $region37: #{_forward_jit.1} parent=1 // pred_fallthru
      _
    %v55 = vld [vmem:[%s0] sm:$0xf]
    %v56 = vld [vmem:[%s0 + $0x4] sm:$0xf]
    %v57 = vld [vmem:[%s1] sm:$0xf]
    %v58 = vld [vmem:[%s1 + $0x4] sm:$0xf]
    %v59 = vld [vmem:[%s2] sm:$0x1]
    %v61 = vlaneseq
    %v62 = vshrl.u32 %v61, 7
    %v63 = vsub.s32 0, %v62
    %v64 = vrot.slane %v59, %v63
    %v68 = vunpack.c.l.b16 %v55
    %v69 = vunpack.c.l.b16 %v56
    %v70 = vpack.c.b16 %v69, %v68
    %v73 = vunpack.c.l.b16 %v57
    %v74 = vunpack.c.l.b16 %v58
    %v75 = vpack.c.b16 %v74, %v73
    %vm77 = vcmask 130048
    %v79 = vsel %vm77, %v70, 0
    %81 = vmatprep.subr.bf16.mxu0 0
    %82 = vmatpush1.bf16.msra.mxu0 0
    %83 = vmatprep.subr.bf16.mxu0 0
    %84 = vmatpush1.bf16.msra.mxu0 0
    %85 = vmatprep.subr.bf16.mxu0 0
    %86 = vmatpush1.bf16.msra.mxu0 0
    %87 = vmatprep.subr.bf16.mxu0 0
    %88 = vmatpush1.bf16.msra.mxu0 0
    %89 = vmatprep.subr.bf16.mxu0 0
    %90 = vmatpush1.bf16.msra.mxu0 0
    %91 = vmatprep.subr.bf16.mxu0 0
    %92 = vmatpush1.bf16.msra.mxu0 0
    %93 = vmatprep.subr.bf16.mxu0 0
    %94 = vmatpush1.bf16.msra.mxu0 0
    %95 = vmatprep.subr.bf16.mxu0 0
    %96 = vmatpush1.bf16.msra.mxu0 %v75
    %97 = vmatprep.subr.bf16.mxu0 0
    %98 = vmatpush2.bf16.msra.mxu0 0
    %99 = vmatprep.subr.bf16.mxu0 0
    %100 = vmatpush2.bf16.msra.mxu0 0
    %101 = vmatprep.subr.bf16.mxu0 0
    %102 = vmatpush2.bf16.msra.mxu0 0
    %103 = vmatprep.subr.bf16.mxu0 0
    %104 = vmatpush2.bf16.msra.mxu0 0
    %105 = vmatprep.subr.bf16.mxu0 0
    %106 = vmatpush2.bf16.msra.mxu0 0
    %107 = vmatprep.subr.bf16.mxu0 0
    %108 = vmatpush2.bf16.msra.mxu0 0
    %109 = vmatprep.subr.bf16.mxu0 0
    %110 = vmatpush2.bf16.msra.mxu0 0
    %111 = vmatprep.subr.bf16.mxu0 0
    %112 = vmatpush2.bf16.msra.mxu0 0
    %113 = vmatprep.mubr.bf16.mxu0 0
    %114 = vmatmul.mubr.bf16.gmra.mxu0 %v79
    %v115 = vpop.f32.mrf.mxu0
    %v116 = vadd.f32 %v64, %v115
    %v117 = vpop.f32.mrf.mxu0
    %v118 = vpop.f32.mrf.mxu0
    %v119 = vadd.f32 %v64, %v118
    %v120 = vpop.f32.mrf.mxu0
    %121 = vdwg.mxu0
    %v122 = vmax.f32 %v116, 0.0
    %v123 = vmax.f32 %v119, 0.0
    %v124 = vpack.c.bf16 %v123, %v122
    %v125 = vld [vmem:[#allocation2] sm:$0xf]
    %v126 = vld [vmem:[#allocation2 + $0x4] sm:$0xf]
    %v127 = vld [vmem:[#allocation2 + $0x8] sm:$0xf]
    %v128 = vld [vmem:[#allocation2 + $0xc] sm:$0xf]
    %v129 = vld [vmem:[#allocation2 + $0x10] sm:$0xf]
    %v130 = vld [vmem:[#allocation2 + $0x14] sm:$0xf]
    %v131 = vld [vmem:[#allocation2 + $0x18] sm:$0xf]
    %v132 = vld [vmem:[#allocation2 + $0x1c] sm:$0xf]
    %v133 = vld [vmem:[#allocation2 + $0x20] sm:$0xf]
    %v134 = vld [vmem:[#allocation2 + $0x24] sm:$0xf]
    %v135 = vld [vmem:[#allocation2 + $0x28] sm:$0xf]
    %v136 = vld [vmem:[#allocation2 + $0x2c] sm:$0xf]
    %v137 = vld [vmem:[#allocation2 + $0x30] sm:$0xf]
    %v138 = vld [vmem:[#allocation2 + $0x34] sm:$0xf]
    %v139 = vld [vmem:[#allocation2 + $0x38] sm:$0xf]
    %v140 = vld [vmem:[#allocation2 + $0x3c] sm:$0xf]
    %v141 = vld [vmem:[%s4] sm:$0x1]
    %v143 = vlaneseq
    %v144 = vshrl.u32 %v143, 7
    %v145 = vsub.s32 0, %v144
    %v146 = vrot.slane %v141, %v145
    %v164 = vunpack.c.l.b16 %v125
    %v165 = vunpack.c.l.b16 %v126
    %v166 = vunpack.c.l.b16 %v127
    %v167 = vunpack.c.l.b16 %v128
    %v168 = vunpack.c.l.b16 %v129
    %v169 = vunpack.c.l.b16 %v130
    %v170 = vunpack.c.l.b16 %v131
    %v171 = vunpack.c.l.b16 %v132
    %v172 = vunpack.c.l.b16 %v133
    %v173 = vunpack.c.l.b16 %v134
    %v174 = vunpack.c.l.b16 %v135
    %v175 = vunpack.c.l.b16 %v136
    %v176 = vunpack.c.l.b16 %v137
    %v177 = vunpack.c.l.b16 %v138
    %v178 = vunpack.c.l.b16 %v139
    %v179 = vunpack.c.l.b16 %v140
    %v180 = vpack.c.b16 %v165, %v164
    %v181 = vpack.c.b16 %v167, %v166
    %v182 = vpack.c.b16 %v169, %v168
    %v183 = vpack.c.b16 %v171, %v170
    %v184 = vpack.c.b16 %v173, %v172
    %v185 = vpack.c.b16 %v175, %v174
    %v186 = vpack.c.b16 %v177, %v176
    %v187 = vpack.c.b16 %v179, %v178
    %196 = vmatprep.subr.bf16.mxu0 0
    %197 = vmatpush1.bf16.msra.mxu0 %v187
    %198 = vmatprep.subr.bf16.mxu0 0
    %199 = vmatpush1.bf16.msra.mxu0 %v186
    %200 = vmatprep.subr.bf16.mxu0 0
    %201 = vmatpush1.bf16.msra.mxu0 %v185
    %202 = vmatprep.subr.bf16.mxu0 0
    %203 = vmatpush1.bf16.msra.mxu0 %v184
    %204 = vmatprep.subr.bf16.mxu0 0
    %205 = vmatpush1.bf16.msra.mxu0 %v183
    %206 = vmatprep.subr.bf16.mxu0 0
    %207 = vmatpush1.bf16.msra.mxu0 %v182
    %208 = vmatprep.subr.bf16.mxu0 0
    %209 = vmatpush1.bf16.msra.mxu0 %v181
    %210 = vmatprep.subr.bf16.mxu0 0
    %211 = vmatpush1.bf16.msra.mxu0 %v180
    %212 = vmatprep.subr.bf16.mxu0 0
    %213 = vmatpush2.bf16.msra.mxu0 0
    %214 = vmatprep.subr.bf16.mxu0 0
    %215 = vmatpush2.bf16.msra.mxu0 0
    %216 = vmatprep.subr.bf16.mxu0 0
    %217 = vmatpush2.bf16.msra.mxu0 0
    %218 = vmatprep.subr.bf16.mxu0 0
    %219 = vmatpush2.bf16.msra.mxu0 0
    %220 = vmatprep.subr.bf16.mxu0 0
    %221 = vmatpush2.bf16.msra.mxu0 0
    %222 = vmatprep.subr.bf16.mxu0 0
    %223 = vmatpush2.bf16.msra.mxu0 0
    %224 = vmatprep.subr.bf16.mxu0 0
    %225 = vmatpush2.bf16.msra.mxu0 0
    %226 = vmatprep.subr.bf16.mxu0 0
    %227 = vmatpush2.bf16.msra.mxu0 0
    %228 = vmatprep.mubr.bf16.mxu0 0
    %229 = vmatmul.mubr.bf16.gmra.mxu0 %v124
    %v230 = vpop.f32.mrf.mxu0
    %v231 = vadd.f32 %v146, %v230
    %v232 = vpop.f32.mrf.mxu0
    %v233 = vpop.f32.mrf.mxu0
    %v234 = vadd.f32 %v146, %v233
    %v235 = vpop.f32.mrf.mxu0
    %236 = vdwg.mxu0
    %v237 = vmax.f32 %v231, 0.0
    %v238 = vmax.f32 %v234, 0.0
    %v239 = vpack.c.bf16 %v238, %v237
    %v240 = vld [vmem:[#allocation4] sm:$0xf]
    %v241 = vld [vmem:[#allocation4 + $0x4] sm:$0xf]
    %v242 = vld [vmem:[#allocation4 + $0x8] sm:$0xf]
    %v243 = vld [vmem:[#allocation4 + $0xc] sm:$0xf]
    %v244 = vld [vmem:[#allocation4 + $0x10] sm:$0xf]
    %v245 = vld [vmem:[#allocation4 + $0x14] sm:$0xf]
    %v246 = vld [vmem:[#allocation4 + $0x18] sm:$0xf]
    %v247 = vld [vmem:[#allocation4 + $0x1c] sm:$0xf]
    %v248 = vld [vmem:[#allocation4 + $0x20] sm:$0xf]
    %v249 = vld [vmem:[#allocation4 + $0x24] sm:$0xf]
    %v250 = vld [vmem:[#allocation4 + $0x28] sm:$0xf]
    %v251 = vld [vmem:[#allocation4 + $0x2c] sm:$0xf]
    %v252 = vld [vmem:[#allocation4 + $0x30] sm:$0xf]
    %v253 = vld [vmem:[#allocation4 + $0x34] sm:$0xf]
    %v254 = vld [vmem:[#allocation4 + $0x38] sm:$0xf]
    %v255 = vld [vmem:[#allocation4 + $0x3c] sm:$0xf]
    %v256 = vld [vmem:[%s6] sm:$0x1]
    %v258 = vlaneseq
    %v259 = vshrl.u32 %v258, 7
    %v260 = vsub.s32 0, %v259
    %v261 = vrot.slane %v256, %v260
    %v279 = vunpack.c.l.b16 %v240
    %v280 = vunpack.c.l.b16 %v241
    %v281 = vunpack.c.l.b16 %v242
    %v282 = vunpack.c.l.b16 %v243
    %v283 = vunpack.c.l.b16 %v244
    %v284 = vunpack.c.l.b16 %v245
    %v285 = vunpack.c.l.b16 %v246
    %v286 = vunpack.c.l.b16 %v247
    %v287 = vunpack.c.l.b16 %v248
    %v288 = vunpack.c.l.b16 %v249
    %v289 = vunpack.c.l.b16 %v250
    %v290 = vunpack.c.l.b16 %v251
    %v291 = vunpack.c.l.b16 %v252
    %v292 = vunpack.c.l.b16 %v253
    %v293 = vunpack.c.l.b16 %v254
    %v294 = vunpack.c.l.b16 %v255
    %v295 = vpack.c.b16 %v280, %v279
    %v296 = vpack.c.b16 %v282, %v281
    %v297 = vpack.c.b16 %v284, %v283
    %v298 = vpack.c.b16 %v286, %v285
    %v299 = vpack.c.b16 %v288, %v287
    %v300 = vpack.c.b16 %v290, %v289
    %v301 = vpack.c.b16 %v292, %v291
    %v302 = vpack.c.b16 %v294, %v293
    %311 = vmatprep.subr.bf16.mxu0 0
    %312 = vmatpush1.bf16.msra.mxu0 %v302
    %313 = vmatprep.subr.bf16.mxu0 0
    %314 = vmatpush1.bf16.msra.mxu0 %v301
    %315 = vmatprep.subr.bf16.mxu0 0
    %316 = vmatpush1.bf16.msra.mxu0 %v300
    %317 = vmatprep.subr.bf16.mxu0 0
    %318 = vmatpush1.bf16.msra.mxu0 %v299
    %319 = vmatprep.subr.bf16.mxu0 0
    %320 = vmatpush1.bf16.msra.mxu0 %v298
    %321 = vmatprep.subr.bf16.mxu0 0
    %322 = vmatpush1.bf16.msra.mxu0 %v297
    %323 = vmatprep.subr.bf16.mxu0 0
    %324 = vmatpush1.bf16.msra.mxu0 %v296
    %325 = vmatprep.subr.bf16.mxu0 0
    %326 = vmatpush1.bf16.msra.mxu0 %v295
    %327 = vmatprep.subr.bf16.mxu0 0
    %328 = vmatpush2.bf16.msra.mxu0 0
    %329 = vmatprep.subr.bf16.mxu0 0
    %330 = vmatpush2.bf16.msra.mxu0 0
    %331 = vmatprep.subr.bf16.mxu0 0
    %332 = vmatpush2.bf16.msra.mxu0 0
    %333 = vmatprep.subr.bf16.mxu0 0
    %334 = vmatpush2.bf16.msra.mxu0 0
    %335 = vmatprep.subr.bf16.mxu0 0
    %336 = vmatpush2.bf16.msra.mxu0 0
    %337 = vmatprep.subr.bf16.mxu0 0
    %338 = vmatpush2.bf16.msra.mxu0 0
    %339 = vmatprep.subr.bf16.mxu0 0
    %340 = vmatpush2.bf16.msra.mxu0 0
    %341 = vmatprep.subr.bf16.mxu0 0
    %342 = vmatpush2.bf16.msra.mxu0 0
    %343 = vmatprep.mubr.bf16.mxu0 0
    %344 = vmatmul.mubr.bf16.gmra.mxu0 %v239
    %v345 = vpop.f32.mrf.mxu0
    %v346 = vadd.f32 %v261, %v345
    %v347 = vpop.f32.mrf.mxu0
    %v348 = vpop.f32.mrf.mxu0
    %v349 = vadd.f32 %v261, %v348
    %v350 = vpop.f32.mrf.mxu0
    %351 = vdwg.mxu0
    %352 = vst [vmem:[%s7] sm:$0xff] %v346
    %353 = vst [vmem:[%s7 + $0x8] sm:$0xff] %v349
    // Predicated region
    $region38: #{_forward_jit.1} parent=1 // pred_check
      _
    $region39: #{_forward_jit.1} parent=1 // pred_check_branch
      %355 = sbr.rel (0) target = $region41
    $region40: #{_forward_jit.1} parent=1 // pred_region
      _
    $region41: #{_forward_jit.1} parent=1 // pred_fallthru
      _
    // Predicated region
    $region42: #{_forward_jit.1} parent=1 // pred_check
      _
    $region43: #{_forward_jit.1} parent=1 // pred_check_branch
      %357 = sbr.rel (0) target = $region45
    $region44: #{_forward_jit.1} parent=1 // pred_region
      _
    $region45: #{_forward_jit.1} parent=1 // pred_fallthru
      _
    %358 = vsyncpa [#allocation3], 1
    %359 = vsyncpa [#allocation5], 1

</llo_original>
